<compile_context>
chip_gen: v7x
topology: tpu7x:2x2x1
jax: 0.10.0
libtpu: 0.0.40
codegen_flags: <defaults>
</compile_context>

<pallas_src>
import functools

import jax
import jax.numpy as jnp
from jax.experimental import pallas as pl
from jax.experimental.pallas import tpu as pltpu


def rnn_classifier_kernel(xf_ref, wih_ref, whh_ref, bias_ref, wfc_ref, bfc_ref,
                          out_ref, xp_ref, *, seq_len, batch_pad):
    """Single-invocation RNN classifier forward.

    xf_ref  : (seq_len*batch_pad, input_size)  flattened, batch-padded input
    wih_ref : (input_size, hidden)             W_ih^T
    whh_ref : (hidden, hidden)                 W_hh^T
    bias_ref: (1, hidden)                      b_ih + b_hh (pre-summed)
    wfc_ref : (hidden, classes_pad)            W_fc^T, lane-padded
    bfc_ref : (1, classes_pad)                 b_fc, lane-padded
    out_ref : (batch_pad, classes_pad)         logits (padded)
    xp_ref  : VMEM scratch (seq_len*batch_pad, hidden)
    """
    # Phase 1 (parallel): hoisted input projection as one large MXU matmul,
    # bias folded in.  xp[t*Bp:(t+1)*Bp] = x_t @ W_ih^T + (b_ih + b_hh)
    xp_ref[...] = (jnp.dot(xf_ref[...], wih_ref[...],
                           preferred_element_type=jnp.float32)
                   + bias_ref[...])

    whh = whh_ref[...]                              # resident (hidden, hidden)
    hidden = whh.shape[0]

    # Phase 2 (serial): recurrence; h carried through the loop in vregs.
    def step(t, h):
        xp_t = xp_ref[pl.ds(t * batch_pad, batch_pad), :]   # (batch_pad, hidden)
        return jnp.tanh(xp_t + jnp.dot(h, whh,
                                       preferred_element_type=jnp.float32))

    h0 = jnp.zeros((batch_pad, hidden), jnp.float32)
    h_last = jax.lax.fori_loop(0, seq_len, step, h0, unroll=True)

    # Phase 3: final FC on the last hidden state, lane-dense (classes padded to 128).
    out_ref[...] = (jnp.dot(h_last, wfc_ref[...],
                            preferred_element_type=jnp.float32)
                    + bfc_ref[...])


def rnn_classifier_forward(x, params):
    """x: (seq_len, batch, input_size) float32. Returns (batch, classes) float32."""
    seq_len, batch, input_size = x.shape
    hidden = params["w_hh"].shape[0]
    classes = params["w_fc"].shape[0]

    batch_pad = max(8, ((batch + 7) // 8) * 8)          # sublane width
    classes_pad = max(128, ((classes + 127) // 128) * 128)  # lane width

    # Pad batch with zero rows and flatten (seq, batch) for the hoisted projection.
    x_p = jnp.pad(x, ((0, 0), (0, batch_pad - batch), (0, 0)))
    xf = x_p.reshape(seq_len * batch_pad, input_size)

    wih_t = params["w_ih"].T.astype(jnp.float32)                  # (I, H)
    whh_t = params["w_hh"].T.astype(jnp.float32)                  # (H, H)
    bias = (params["b_ih"] + params["b_hh"]).reshape(1, hidden)   # (1, H)
    wfc_t = jnp.pad(params["w_fc"].T,
                    ((0, 0), (0, classes_pad - classes)))         # (H, Cp)
    bfc = jnp.pad(params["b_fc"],
                  (0, classes_pad - classes)).reshape(1, classes_pad)

    kernel = functools.partial(rnn_classifier_kernel,
                               seq_len=seq_len, batch_pad=batch_pad)

    out_pad = pl.pallas_call(
        kernel,
        out_shape=jax.ShapeDtypeStruct((batch_pad, classes_pad), jnp.float32),
        in_specs=[pl.BlockSpec(memory_space=pltpu.MemorySpace.VMEM)] * 6,
        out_specs=pl.BlockSpec(memory_space=pltpu.MemorySpace.VMEM),
        scratch_shapes=[pltpu.VMEM((seq_len * batch_pad, hidden), jnp.float32)],
    )(xf, wih_t, whh_t, bias, wfc_t, bfc)

    return out_pad[:batch, :classes]


def init_params(key, input_size=28, hidden_size=128, classes=10):
    """Deterministic init mimicking PyTorch's uniform(-1/sqrt(H), 1/sqrt(H))."""
    ks = jax.random.split(key, 6)
    bound = 1.0 / jnp.sqrt(hidden_size)
    u = lambda k, shape: jax.random.uniform(k, shape, jnp.float32, -bound, bound)
    return {
        "w_ih": u(ks[0], (hidden_size, input_size)),
        "w_hh": u(ks[1], (hidden_size, hidden_size)),
        "b_ih": u(ks[2], (hidden_size,)),
        "b_hh": u(ks[3], (hidden_size,)),
        "w_fc": u(ks[4], (classes, hidden_size)),
        "b_fc": u(ks[5], (classes,)),
    }


def reference_forward(x, p):
    """Pure-JAX reference of the PyTorch forward (for correctness check)."""
    seq_len, batch, _ = x.shape
    h = jnp.zeros((batch, p["w_hh"].shape[0]), jnp.float32)
    for t in range(seq_len):
        h = jnp.tanh(x[t] @ p["w_ih"].T + p["b_ih"] + h @ p["w_hh"].T + p["b_hh"])
    return h @ p["w_fc"].T + p["b_fc"]


if __name__ == "__main__":
    key = jax.random.PRNGKey(0)
    k_x, k_p = jax.random.split(key)

    seq_len, batch, input_size, hidden_size, classes = 8, 2, 28, 128, 10
    x = jax.random.normal(k_x, (seq_len, batch, input_size), jnp.float32)
    params = init_params(k_p, input_size, hidden_size, classes)

    out = rnn_classifier_forward(x, params)
    out = jax.block_until_ready(out)

    ref = reference_forward(x, params)
    assert out.shape == (batch, classes)
    assert jnp.allclose(out, ref, atol=1e-4, rtol=1e-4)

    print("KERNEL_OK")
</pallas_src>

<mosaic_0001>
module attributes {stable_mosaic.version = 11 : i64} {
  func.func @rnn_classifier_kernel(%arg0: memref<64x28xf32, #tpu.memory_space<vmem>>, %arg1: memref<28x128xf32, #tpu.memory_space<vmem>>, %arg2: memref<128x128xf32, #tpu.memory_space<vmem>>, %arg3: memref<1x128xf32, #tpu.memory_space<vmem>>, %arg4: memref<128x128xf32, #tpu.memory_space<vmem>>, %arg5: memref<1x128xf32, #tpu.memory_space<vmem>>, %arg6: memref<8x128xf32, #tpu.memory_space<vmem>>, %arg7: memref<64x128xf32, #tpu.memory_space<vmem>>) attributes {dimension_semantics = [], scalar_prefetch = 0 : i64, scratch_operands = 1 : i64, tpu.core_type = #tpu.core_type<tc>} {
    %c0 = arith.constant 0 : index
    %c0_0 = arith.constant 0 : index
    %0 = vector.load %arg0[%c0, %c0_0] : memref<64x28xf32, #tpu.memory_space<vmem>>, vector<64x28xf32>
    %c0_1 = arith.constant 0 : index
    %c0_2 = arith.constant 0 : index
    %1 = vector.load %arg1[%c0_1, %c0_2] : memref<28x128xf32, #tpu.memory_space<vmem>>, vector<28x128xf32>
    %cst = arith.constant dense<0.000000e+00> : vector<64x128xf32>
    %2 = tpu.matmul %0, %1, %cst {dimension_numbers = #tpu.dot_dimension_numbers<[1], [0], [0], [1], [0, 0, 1, 1], [], []>} : vector<64x28xf32>, vector<28x128xf32>, vector<64x128xf32> -> vector<64x128xf32>
    %c0_3 = arith.constant 0 : index
    %c0_4 = arith.constant 0 : index
    %3 = vector.load %arg3[%c0_3, %c0_4] : memref<1x128xf32, #tpu.memory_space<vmem>>, vector<1x128xf32>
    %4 = vector.broadcast %3 : vector<1x128xf32> to vector<64x128xf32>
    %5 = arith.addf %2, %4 : vector<64x128xf32>
    %c0_5 = arith.constant 0 : index
    %c0_6 = arith.constant 0 : index
    %6 = vector.load %arg7[%c0_5, %c0_6] : memref<64x128xf32, #tpu.memory_space<vmem>>, vector<64x128xf32>
    tpu.vector_store %arg7[%c0_5, %c0_6], %5 {strides = array<i32>} : memref<64x128xf32, #tpu.memory_space<vmem>>, vector<64x128xf32>,
    %c0_7 = arith.constant 0 : index
    %c0_8 = arith.constant 0 : index
    %7 = vector.load %arg2[%c0_7, %c0_8] : memref<128x128xf32, #tpu.memory_space<vmem>>, vector<128x128xf32>
    %cst_9 = arith.constant 0.000000e+00 : f32
    %8 = vector.broadcast %cst_9 : f32 to vector<8x128xf32>
    %c0_i32 = arith.constant 0 : i32
    %c8_i32 = arith.constant 8 : i32
    %9 = arith.muli %c0_i32, %c8_i32 : i32
    %10 = arith.index_cast %9 : i32 to index
    %c0_10 = arith.constant 0 : index
    %11 = vector.load %arg7[%10, %c0_10] : memref<64x128xf32, #tpu.memory_space<vmem>>, vector<8x128xf32>
    %cst_11 = arith.constant dense<0.000000e+00> : vector<8x128xf32>
    %12 = tpu.matmul %8, %7, %cst_11 {dimension_numbers = #tpu.dot_dimension_numbers<[1], [0], [0], [1], [0, 0, 1, 1], [], []>} : vector<8x128xf32>, vector<128x128xf32>, vector<8x128xf32> -> vector<8x128xf32>
    %13 = arith.addf %11, %12 : vector<8x128xf32>
    %14 = math.tanh %13 : vector<8x128xf32>
    %c1_i32 = arith.constant 1 : i32
    %c8_i32_12 = arith.constant 8 : i32
    %15 = arith.muli %c1_i32, %c8_i32_12 : i32
    %16 = arith.index_cast %15 : i32 to index
    %c0_13 = arith.constant 0 : index
    %17 = vector.load %arg7[%16, %c0_13] : memref<64x128xf32, #tpu.memory_space<vmem>>, vector<8x128xf32>
    %cst_14 = arith.constant dense<0.000000e+00> : vector<8x128xf32>
    %18 = tpu.matmul %14, %7, %cst_14 {dimension_numbers = #tpu.dot_dimension_numbers<[1], [0], [0], [1], [0, 0, 1, 1], [], []>} : vector<8x128xf32>, vector<128x128xf32>, vector<8x128xf32> -> vector<8x128xf32>
    %19 = arith.addf %17, %18 : vector<8x128xf32>
    %20 = math.tanh %19 : vector<8x128xf32>
    %c2_i32 = arith.constant 2 : i32
    %c8_i32_15 = arith.constant 8 : i32
    %21 = arith.muli %c2_i32, %c8_i32_15 : i32
    %22 = arith.index_cast %21 : i32 to index
    %c0_16 = arith.constant 0 : index
    %23 = vector.load %arg7[%22, %c0_16] : memref<64x128xf32, #tpu.memory_space<vmem>>, vector<8x128xf32>
    %cst_17 = arith.constant dense<0.000000e+00> : vector<8x128xf32>
    %24 = tpu.matmul %20, %7, %cst_17 {dimension_numbers = #tpu.dot_dimension_numbers<[1], [0], [0], [1], [0, 0, 1, 1], [], []>} : vector<8x128xf32>, vector<128x128xf32>, vector<8x128xf32> -> vector<8x128xf32>
    %25 = arith.addf %23, %24 : vector<8x128xf32>
    %26 = math.tanh %25 : vector<8x128xf32>
    %c3_i32 = arith.constant 3 : i32
    %c8_i32_18 = arith.constant 8 : i32
    %27 = arith.muli %c3_i32, %c8_i32_18 : i32
    %28 = arith.index_cast %27 : i32 to index
    %c0_19 = arith.constant 0 : index
    %29 = vector.load %arg7[%28, %c0_19] : memref<64x128xf32, #tpu.memory_space<vmem>>, vector<8x128xf32>
    %cst_20 = arith.constant dense<0.000000e+00> : vector<8x128xf32>
    %30 = tpu.matmul %26, %7, %cst_20 {dimension_numbers = #tpu.dot_dimension_numbers<[1], [0], [0], [1], [0, 0, 1, 1], [], []>} : vector<8x128xf32>, vector<128x128xf32>, vector<8x128xf32> -> vector<8x128xf32>
    %31 = arith.addf %29, %30 : vector<8x128xf32>
    %32 = math.tanh %31 : vector<8x128xf32>
    %c4_i32 = arith.constant 4 : i32
    %c8_i32_21 = arith.constant 8 : i32
    %33 = arith.muli %c4_i32, %c8_i32_21 : i32
    %34 = arith.index_cast %33 : i32 to index
    %c0_22 = arith.constant 0 : index
    %35 = vector.load %arg7[%34, %c0_22] : memref<64x128xf32, #tpu.memory_space<vmem>>, vector<8x128xf32>
    %cst_23 = arith.constant dense<0.000000e+00> : vector<8x128xf32>
    %36 = tpu.matmul %32, %7, %cst_23 {dimension_numbers = #tpu.dot_dimension_numbers<[1], [0], [0], [1], [0, 0, 1, 1], [], []>} : vector<8x128xf32>, vector<128x128xf32>, vector<8x128xf32> -> vector<8x128xf32>
    %37 = arith.addf %35, %36 : vector<8x128xf32>
    %38 = math.tanh %37 : vector<8x128xf32>
    %c5_i32 = arith.constant 5 : i32
    %c8_i32_24 = arith.constant 8 : i32
    %39 = arith.muli %c5_i32, %c8_i32_24 : i32
    %40 = arith.index_cast %39 : i32 to index
    %c0_25 = arith.constant 0 : index
    %41 = vector.load %arg7[%40, %c0_25] : memref<64x128xf32, #tpu.memory_space<vmem>>, vector<8x128xf32>
    %cst_26 = arith.constant dense<0.000000e+00> : vector<8x128xf32>
    %42 = tpu.matmul %38, %7, %cst_26 {dimension_numbers = #tpu.dot_dimension_numbers<[1], [0], [0], [1], [0, 0, 1, 1], [], []>} : vector<8x128xf32>, vector<128x128xf32>, vector<8x128xf32> -> vector<8x128xf32>
    %43 = arith.addf %41, %42 : vector<8x128xf32>
    %44 = math.tanh %43 : vector<8x128xf32>
    %c6_i32 = arith.constant 6 : i32
    %c8_i32_27 = arith.constant 8 : i32
    %45 = arith.muli %c6_i32, %c8_i32_27 : i32
    %46 = arith.index_cast %45 : i32 to index
    %c0_28 = arith.constant 0 : index
    %47 = vector.load %arg7[%46, %c0_28] : memref<64x128xf32, #tpu.memory_space<vmem>>, vector<8x128xf32>
    %cst_29 = arith.constant dense<0.000000e+00> : vector<8x128xf32>
    %48 = tpu.matmul %44, %7, %cst_29 {dimension_numbers = #tpu.dot_dimension_numbers<[1], [0], [0], [1], [0, 0, 1, 1], [], []>} : vector<8x128xf32>, vector<128x128xf32>, vector<8x128xf32> -> vector<8x128xf32>
    %49 = arith.addf %47, %48 : vector<8x128xf32>
    %50 = math.tanh %49 : vector<8x128xf32>
    %c7_i32 = arith.constant 7 : i32
    %c8_i32_30 = arith.constant 8 : i32
    %51 = arith.muli %c7_i32, %c8_i32_30 : i32
    %52 = arith.index_cast %51 : i32 to index
    %c0_31 = arith.constant 0 : index
    %53 = vector.load %arg7[%52, %c0_31] : memref<64x128xf32, #tpu.memory_space<vmem>>, vector<8x128xf32>
    %cst_32 = arith.constant dense<0.000000e+00> : vector<8x128xf32>
    %54 = tpu.matmul %50, %7, %cst_32 {dimension_numbers = #tpu.dot_dimension_numbers<[1], [0], [0], [1], [0, 0, 1, 1], [], []>} : vector<8x128xf32>, vector<128x128xf32>, vector<8x128xf32> -> vector<8x128xf32>
    %55 = arith.addf %53, %54 : vector<8x128xf32>
    %56 = math.tanh %55 : vector<8x128xf32>
    %c8_i32_33 = arith.constant 8 : i32
    %c0_34 = arith.constant 0 : index
    %c0_35 = arith.constant 0 : index
    %57 = vector.load %arg4[%c0_34, %c0_35] : memref<128x128xf32, #tpu.memory_space<vmem>>, vector<128x128xf32>
    %cst_36 = arith.constant dense<0.000000e+00> : vector<8x128xf32>
    %58 = tpu.matmul %56, %57, %cst_36 {dimension_numbers = #tpu.dot_dimension_numbers<[1], [0], [0], [1], [0, 0, 1, 1], [], []>} : vector<8x128xf32>, vector<128x128xf32>, vector<8x128xf32> -> vector<8x128xf32>
    %c0_37 = arith.constant 0 : index
    %c0_38 = arith.constant 0 : index
    %59 = vector.load %arg5[%c0_37, %c0_38] : memref<1x128xf32, #tpu.memory_space<vmem>>, vector<1x128xf32>
    %60 = vector.broadcast %59 : vector<1x128xf32> to vector<8x128xf32>
    %61 = arith.addf %58, %60 : vector<8x128xf32>
    %c0_39 = arith.constant 0 : index
    %c0_40 = arith.constant 0 : index
    %62 = vector.load %arg6[%c0_39, %c0_40] : memref<8x128xf32, #tpu.memory_space<vmem>>, vector<8x128xf32>
    tpu.vector_store %arg6[%c0_39, %c0_40], %61 {strides = array<i32>} : memref<8x128xf32, #tpu.memory_space<vmem>>, vector<8x128xf32>,
    return
  }
}

</mosaic_0001>

<llo_original>
// kernel: tpu_custom_call.1
$region0: #{tpu_custom_call.1}
  #allocation0 [shape = 'u32[]', space=smem, size = 0x4, offset = 0x4, fixed_abs, tag = 'smem constant byte address 0x4 - core index']
  #allocation1 [shape = 'u32[144,128]{1,0:T(1,128)}', space=vmem, size = 0x12000, scoped, tag = 'internal scratch']
  #allocation2 [shape = 'f32[64,128]{1,0:T(8,128)}', space=vmem, size = 0x8000, scoped, tag = 'scratch operand']
  %s0 = inlined_call_operand.vmem [shape: f32[64,28], index: 0, kind: input, shape index: {}]
  %s1 = inlined_call_operand.vmem [shape: f32[28,128], index: 1, kind: input, shape index: {}]
  %s2 = inlined_call_operand.hbm [shape: f32[128,128], index: 2, kind: input, shape index: {}]
  %s3 = inlined_call_operand.vmem [shape: f32[1,128], index: 3, kind: input, shape index: {}]
  %s4 = inlined_call_operand.hbm [shape: f32[128,128], index: 4, kind: input, shape index: {}]
  %s5 = inlined_call_operand.vmem [shape: f32[1,128], index: 5, kind: input, shape index: {}]
  %s6 = inlined_call_operand.hbm [shape: f32[8,128], index: 6, kind: output, shape index: {}]
  %s7 = sld [smem:[#allocation0]]
  $region42: #{tpu_custom_call.1} parent=0
    _
  %s9 = ssub.s32 1, %s7
  %s10 = scalar_select 0, %s9, %s7
  $region1: #{tpu_custom_call.1} parent=0
    #allocation3 [shape = 'u8[65536]{0}', space=vmem, size = 0x10000, scoped, tag = 'input window, operand 2, single buffered']
    #allocation4 [shape = 's32[1]{0}', space=sflag, size = 0x4, scoped, tag = 'scoped memory for tpu_custom_call.1']
    #allocation5 [shape = 's32[1]{0}', space=sflag, size = 0x4, scoped, tag = 'scoped memory for tpu_custom_call.1']
    #allocation6 [shape = 'u8[65536]{0}', space=vmem, size = 0x10000, scoped, tag = 'input window, operand 4, single buffered']
    #allocation7 [shape = 's32[1]{0}', space=sflag, size = 0x4, scoped, tag = 'scoped memory for tpu_custom_call.1']
    #allocation8 [shape = 'u8[4096]{0}', space=vmem, size = 0x1000, scoped, tag = 'output window, operand 0, single buffered']
    %11 = vsyncpa [#allocation4], 0
    %12 = vsyncpa [#allocation7], 0
    %13 = vsyncpa [#allocation5], 0
    // Predicated region
    $region2: #{tpu_custom_call.1} parent=1 // pred_check
      _
    $region3: #{tpu_custom_call.1} parent=1 // pred_check_branch
      %15 = sbr.rel (0) target = $region5
    $region4: #{tpu_custom_call.1} parent=1 // pred_region
      _
    $region5: #{tpu_custom_call.1} parent=1 // pred_fallthru
      _
    // Predicated region
    $region6: #{tpu_custom_call.1} parent=1 // pred_check
      _
    $region7: #{tpu_custom_call.1} parent=1 // pred_check_branch
      %17 = sbr.rel (0) target = $region9
    $region8: #{tpu_custom_call.1} parent=1 // pred_region
      _
    $region9: #{tpu_custom_call.1} parent=1 // pred_fallthru
      _
    // Predicated region
    $region10: #{tpu_custom_call.1} parent=1 // pred_check
      _
    $region11: #{tpu_custom_call.1} parent=1 // pred_check_branch
      %19 = sbr.rel (0) target = $region13
    $region12: #{tpu_custom_call.1} parent=1 // pred_region
      %s21 = ssub.s32 2048, 2048
      %22 = vsyncadd [#allocation4], %s21
      %s23 = sshll.u32 [#allocation3], 4
      %s24 = int_to_ptr.vmem [resolvable:$true] %s23
      %29 = dma.hbm_to_vmem [thread:$0]  %s2, 2048, %s24, [#allocation4], 128, 128, 8
    $region13: #{tpu_custom_call.1} parent=1 // pred_fallthru
      _
    // Predicated region
    $region14: #{tpu_custom_call.1} parent=1 // pred_check
      _
    $region15: #{tpu_custom_call.1} parent=1 // pred_check_branch
      %31 = sbr.rel (0) target = $region17
    $region16: #{tpu_custom_call.1} parent=1 // pred_region
      _
    $region17: #{tpu_custom_call.1} parent=1 // pred_fallthru
      _
    // Predicated region
    $region18: #{tpu_custom_call.1} parent=1 // pred_check
      _
    $region19: #{tpu_custom_call.1} parent=1 // pred_check_branch
      %33 = sbr.rel (0) target = $region21
    $region20: #{tpu_custom_call.1} parent=1 // pred_region
      %s35 = ssub.s32 2048, 2048
      %36 = vsyncadd [#allocation7], %s35
      %s37 = sshll.u32 [#allocation6], 4
      %s38 = int_to_ptr.vmem [resolvable:$true] %s37
      %43 = dma.hbm_to_vmem [thread:$0]  %s4, 2048, %s38, [#allocation7], 128, 128, 8
    $region21: #{tpu_custom_call.1} parent=1 // pred_fallthru
      _
    // Predicated region
    $region22: #{tpu_custom_call.1} parent=1 // pred_check
      _
    $region23: #{tpu_custom_call.1} parent=1 // pred_check_branch
      %45 = sbr.rel (0) target = $region25
    $region24: #{tpu_custom_call.1} parent=1 // pred_region
      _
    $region25: #{tpu_custom_call.1} parent=1 // pred_fallthru
      _
    // Predicated region
    $region26: #{tpu_custom_call.1} parent=1 // pred_check
      _
    $region27: #{tpu_custom_call.1} parent=1 // pred_check_branch
      %47 = sbr.rel (0) target = $region29
    $region28: #{tpu_custom_call.1} parent=1 // pred_region
      %48 = dma.done [#allocation4], 2048
    $region29: #{tpu_custom_call.1} parent=1 // pred_fallthru
      _
    // Predicated region
    $region30: #{tpu_custom_call.1} parent=1 // pred_check
      _
    $region31: #{tpu_custom_call.1} parent=1 // pred_check_branch
      %50 = sbr.rel (0) target = $region33
    $region32: #{tpu_custom_call.1} parent=1 // pred_region
      %51 = dma.done [#allocation7], 2048
    $region33: #{tpu_custom_call.1} parent=1 // pred_fallthru
      _
    %v52 = vld [vmem:[%s0] sm:$0xff]
    %v53 = vld [vmem:[%s0 + $0x8] sm:$0xff]
    %v54 = vld [vmem:[%s0 + $0x10] sm:$0xff]
    %v55 = vld [vmem:[%s0 + $0x18] sm:$0xff]
    %v56 = vld [vmem:[%s0 + $0x20] sm:$0xff]
    %v57 = vld [vmem:[%s0 + $0x28] sm:$0xff]
    %v58 = vld [vmem:[%s0 + $0x30] sm:$0xff]
    %v59 = vld [vmem:[%s0 + $0x38] sm:$0xff]
    %v60 = vld [vmem:[%s1] sm:$0xff]
    %v61 = vld [vmem:[%s1 + $0x8] sm:$0xff]
    %v62 = vld [vmem:[%s1 + $0x10] sm:$0xff]
    %v63 = vld [vmem:[%s1 + $0x18] sm:$0xf]
    %v64 = vld [vmem:[%s3] sm:$0x1]
    %v66 = vlaneseq
    %v67 = vshrl.u32 %v66, 7
    %v68 = vsub.s32 0, %v67
    %v69 = vrot.slane %v64, %v68
    %vm71 = vcmask 228352
    %v73 = vsel %vm71, %v52, 0
    %v76 = vsel %vm71, %v53, 0
    %v79 = vsel %vm71, %v54, 0
    %v82 = vsel %vm71, %v55, 0
    %v85 = vsel %vm71, %v56, 0
    %v88 = vsel %vm71, %v57, 0
    %v91 = vsel %vm71, %v58, 0
    %v94 = vsel %vm71, %v59, 0
    %vm96 = vcmask 1043456
    %v98 = vsel %vm96, %v63, 0
    %100 = vmatprep.subr.mxu0 0.0
    %101 = vmatpush1.msra.mxu0 %v60
    %102 = vmatprep.subr.mxu0 0.0
    %103 = vmatpush1.msra.mxu0 %v61
    %104 = vmatprep.subr.mxu0 0.0
    %105 = vmatpush1.msra.mxu0 %v62
    %106 = vmatprep.subr.mxu0 0.0
    %107 = vmatpush1.msra.mxu0 %v98
    %108 = vmatprep.subr.mxu0 0.0
    %109 = vmatpush1.msra.mxu0 0.0
    %110 = vmatprep.subr.mxu0 0.0
    %111 = vmatpush1.msra.mxu0 0.0
    %112 = vmatprep.subr.mxu0 0.0
    %113 = vmatpush1.msra.mxu0 0.0
    %114 = vmatprep.subr.mxu0 0.0
    %115 = vmatpush1.msra.mxu0 0.0
    %116 = vmatprep.subr.mxu0 0.0
    %117 = vmatpush1.msra.mxu0 0.0
    %118 = vmatprep.subr.mxu0 0.0
    %119 = vmatpush1.msra.mxu0 0.0
    %120 = vmatprep.subr.mxu0 0.0
    %121 = vmatpush1.msra.mxu0 0.0
    %122 = vmatprep.subr.mxu0 0.0
    %123 = vmatpush1.msra.mxu0 0.0
    %124 = vmatprep.subr.mxu0 0.0
    %125 = vmatpush1.msra.mxu0 0.0
    %126 = vmatprep.subr.mxu0 0.0
    %127 = vmatpush1.msra.mxu0 0.0
    %128 = vmatprep.subr.mxu0 0.0
    %129 = vmatpush1.msra.mxu0 0.0
    %130 = vmatprep.subr.mxu0 0.0
    %131 = vmatpush1.msra.mxu0 0.0
    %132 = vmatprep.subr.mxu0 0.0
    %133 = vmatpush1.msra.mxu0 0.0
    %134 = vmatprep.subr.mxu0 0.0
    %135 = vmatpush1.msra.mxu0 0.0
    %136 = vmatprep.subr.mxu0 0.0
    %137 = vmatpush1.msra.mxu0 0.0
    %138 = vmatprep.subr.mxu0 0.0
    %139 = vmatpush1.msra.mxu0 0.0
    %140 = vmatprep.subr.mxu0 0.0
    %141 = vmatpush1.msra.mxu0 0.0
    %142 = vmatprep.subr.mxu0 0.0
    %143 = vmatpush1.msra.mxu0 0.0
    %144 = vmatprep.subr.mxu0 0.0
    %145 = vmatpush1.msra.mxu0 0.0
    %146 = vmatprep.subr.mxu0 0.0
    %147 = vmatpush1.msra.mxu0 0.0
    %148 = vmatprep.subr.mxu0 0.0
    %149 = vmatpush1.msra.mxu0 0.0
    %150 = vmatprep.subr.mxu0 0.0
    %151 = vmatpush1.msra.mxu0 0.0
    %152 = vmatprep.subr.mxu0 0.0
    %153 = vmatpush1.msra.mxu0 0.0
    %154 = vmatprep.subr.mxu0 0.0
    %155 = vmatpush1.msra.mxu0 0.0
    %156 = vmatprep.subr.mxu0 0.0
    %157 = vmatpush1.msra.mxu0 0.0
    %158 = vmatprep.subr.mxu0 0.0
    %159 = vmatpush1.msra.mxu0 0.0
    %160 = vmatprep.subr.mxu0 0.0
    %161 = vmatpush1.msra.mxu0 0.0
    %162 = vmatprep.subr.mxu0 0.0
    %163 = vmatpush1.msra.mxu0 0.0
    %164 = vmatprep.mubr.f32.mxu0 0.0
    %165 = vmatmul.mubr.f32.gmra.mrb[0].mxu0 %v73
    %v166 = vpop.f32.mrb[0].mxu0
    %v167 = vadd.f32 %v69, %v166
    %v168 = vpop.f32.mrb[0].mxu0
    %169 = vmatprep.mubr.f32.mxu0 0.0
    %170 = vmatmul.mubr.f32.gmra.mrb[0].mxu0 %v76
    %v171 = vpop.f32.mrb[0].mxu0
    %v172 = vadd.f32 %v69, %v171
    %v173 = vpop.f32.mrb[0].mxu0
    %174 = vmatprep.mubr.f32.mxu0 0.0
    %175 = vmatmul.mubr.f32.gmra.mrb[0].mxu0 %v79
    %v176 = vpop.f32.mrb[0].mxu0
    %v177 = vadd.f32 %v69, %v176
    %v178 = vpop.f32.mrb[0].mxu0
    %179 = vmatprep.mubr.f32.mxu0 0.0
    %180 = vmatmul.mubr.f32.gmra.mrb[0].mxu0 %v82
    %v181 = vpop.f32.mrb[0].mxu0
    %v182 = vadd.f32 %v69, %v181
    %v183 = vpop.f32.mrb[0].mxu0
    %184 = vmatprep.mubr.f32.mxu0 0.0
    %185 = vmatmul.mubr.f32.gmra.mrb[0].mxu0 %v85
    %v186 = vpop.f32.mrb[0].mxu0
    %v187 = vadd.f32 %v69, %v186
    %v188 = vpop.f32.mrb[0].mxu0
    %189 = vmatprep.mubr.f32.mxu0 0.0
    %190 = vmatmul.mubr.f32.gmra.mrb[0].mxu0 %v88
    %v191 = vpop.f32.mrb[0].mxu0
    %v192 = vadd.f32 %v69, %v191
    %v193 = vpop.f32.mrb[0].mxu0
    %194 = vmatprep.mubr.f32.mxu0 0.0
    %195 = vmatmul.mubr.f32.gmra.mrb[0].mxu0 %v91
    %v196 = vpop.f32.mrb[0].mxu0
    %v197 = vadd.f32 %v69, %v196
    %v198 = vpop.f32.mrb[0].mxu0
    %199 = vmatprep.mubr.f32.mxu0 0.0
    %200 = vmatmul.mubr.f32.gmra.mrb[0].mxu0 %v94
    %v201 = vpop.f32.mrb[0].mxu0
    %v202 = vadd.f32 %v69, %v201
    %v203 = vpop.f32.mrb[0].mxu0
    %204 = vdwg.mxu0
    %205 = vst [vmem:[#allocation2] sm:$0xff] %v167
    %206 = vst [vmem:[#allocation2 + $0x8] sm:$0xff] %v172
    %207 = vst [vmem:[#allocation2 + $0x10] sm:$0xff] %v177
    %208 = vst [vmem:[#allocation2 + $0x18] sm:$0xff] %v182
    %209 = vst [vmem:[#allocation2 + $0x20] sm:$0xff] %v187
    %210 = vst [vmem:[#allocation2 + $0x28] sm:$0xff] %v192
    %211 = vst [vmem:[#allocation2 + $0x30] sm:$0xff] %v197
    %212 = vst [vmem:[#allocation2 + $0x38] sm:$0xff] %v202
    %v213 = vld [vmem:[#allocation3] sm:$0xff]
    %v214 = vld [vmem:[#allocation3 + $0x8] sm:$0xff]
    %v215 = vld [vmem:[#allocation3 + $0x10] sm:$0xff]
    %v216 = vld [vmem:[#allocation3 + $0x18] sm:$0xff]
    %v217 = vld [vmem:[#allocation3 + $0x20] sm:$0xff]
    %v218 = vld [vmem:[#allocation3 + $0x28] sm:$0xff]
    %v219 = vld [vmem:[#allocation3 + $0x30] sm:$0xff]
    %v220 = vld [vmem:[#allocation3 + $0x38] sm:$0xff]
    %v221 = vld [vmem:[#allocation3 + $0x40] sm:$0xff]
    %v222 = vld [vmem:[#allocation3 + $0x48] sm:$0xff]
    %v223 = vld [vmem:[#allocation3 + $0x50] sm:$0xff]
    %v224 = vld [vmem:[#allocation3 + $0x58] sm:$0xff]
    %v225 = vld [vmem:[#allocation3 + $0x60] sm:$0xff]
    %v226 = vld [vmem:[#allocation3 + $0x68] sm:$0xff]
    %v227 = vld [vmem:[#allocation3 + $0x70] sm:$0xff]
    %v228 = vld [vmem:[#allocation3 + $0x78] sm:$0xff]
    %v229 = vld [vmem:[#allocation2] sm:$0xff]
    %230 = vmatprep.subr.mxu0 0.0
    %231 = vmatpush1.msra.mxu0 %v213
    %232 = vmatprep.subr.mxu0 0.0
    %233 = vmatpush1.msra.mxu0 %v214
    %234 = vmatprep.subr.mxu0 0.0
    %235 = vmatpush1.msra.mxu0 %v215
    %236 = vmatprep.subr.mxu0 0.0
    %237 = vmatpush1.msra.mxu0 %v216
    %238 = vmatprep.subr.mxu0 0.0
    %239 = vmatpush1.msra.mxu0 %v217
    %240 = vmatprep.subr.mxu0 0.0
    %241 = vmatpush1.msra.mxu0 %v218
    %242 = vmatprep.subr.mxu0 0.0
    %243 = vmatpush1.msra.mxu0 %v219
    %244 = vmatprep.subr.mxu0 0.0
    %245 = vmatpush1.msra.mxu0 %v220
    %246 = vmatprep.subr.mxu0 0.0
    %247 = vmatpush1.msra.mxu0 %v221
    %248 = vmatprep.subr.mxu0 0.0
    %249 = vmatpush1.msra.mxu0 %v222
    %250 = vmatprep.subr.mxu0 0.0
    %251 = vmatpush1.msra.mxu0 %v223
    %252 = vmatprep.subr.mxu0 0.0
    %253 = vmatpush1.msra.mxu0 %v224
    %254 = vmatprep.subr.mxu0 0.0
    %255 = vmatpush1.msra.mxu0 %v225
    %256 = vmatprep.subr.mxu0 0.0
    %257 = vmatpush1.msra.mxu0 %v226
    %258 = vmatprep.subr.mxu0 0.0
    %259 = vmatpush1.msra.mxu0 %v227
    %260 = vmatprep.subr.mxu0 0.0
    %261 = vmatpush1.msra.mxu0 %v228
    %262 = vmatprep.subr.mxu0 0.0
    %263 = vmatpush1.msra.mxu0 0.0
    %264 = vmatprep.subr.mxu0 0.0
    %265 = vmatpush1.msra.mxu0 0.0
    %266 = vmatprep.subr.mxu0 0.0
    %267 = vmatpush1.msra.mxu0 0.0
    %268 = vmatprep.subr.mxu0 0.0
    %269 = vmatpush1.msra.mxu0 0.0
    %270 = vmatprep.subr.mxu0 0.0
    %271 = vmatpush1.msra.mxu0 0.0
    %272 = vmatprep.subr.mxu0 0.0
    %273 = vmatpush1.msra.mxu0 0.0
    %274 = vmatprep.subr.mxu0 0.0
    %275 = vmatpush1.msra.mxu0 0.0
    %276 = vmatprep.subr.mxu0 0.0
    %277 = vmatpush1.msra.mxu0 0.0
    %278 = vmatprep.subr.mxu0 0.0
    %279 = vmatpush1.msra.mxu0 0.0
    %280 = vmatprep.subr.mxu0 0.0
    %281 = vmatpush1.msra.mxu0 0.0
    %282 = vmatprep.subr.mxu0 0.0
    %283 = vmatpush1.msra.mxu0 0.0
    %284 = vmatprep.subr.mxu0 0.0
    %285 = vmatpush1.msra.mxu0 0.0
    %286 = vmatprep.subr.mxu0 0.0
    %287 = vmatpush1.msra.mxu0 0.0
    %288 = vmatprep.subr.mxu0 0.0
    %289 = vmatpush1.msra.mxu0 0.0
    %290 = vmatprep.subr.mxu0 0.0
    %291 = vmatpush1.msra.mxu0 0.0
    %292 = vmatprep.subr.mxu0 0.0
    %293 = vmatpush1.msra.mxu0 0.0
    %294 = vmatprep.mubr.f32.mxu0 0.0
    %295 = vmatmul.mubr.f32.gmra.mrb[0].mxu0 0.0
    %v296 = vpop.f32.mrb[0].mxu0
    %v297 = vadd.f32 0.0, %v296
    %v298 = vpop.f32.mrb[0].mxu0
    %299 = vdwg.mxu0
    %v300 = vadd.f32 %v229, %v297
    %v301 = vtanh.pop %v300
    %v302 = vld [vmem:[#allocation2 + $0x8] sm:$0xff]
    %303 = vmatprep.subr.mxu0 0.0
    %304 = vmatpush1.msra.mxu0 %v213
    %305 = vmatprep.subr.mxu0 0.0
    %306 = vmatpush1.msra.mxu0 %v214
    %307 = vmatprep.subr.mxu0 0.0
    %308 = vmatpush1.msra.mxu0 %v215
    %309 = vmatprep.subr.mxu0 0.0
    %310 = vmatpush1.msra.mxu0 %v216
    %311 = vmatprep.subr.mxu0 0.0
    %312 = vmatpush1.msra.mxu0 %v217
    %313 = vmatprep.subr.mxu0 0.0
    %314 = vmatpush1.msra.mxu0 %v218
    %315 = vmatprep.subr.mxu0 0.0
    %316 = vmatpush1.msra.mxu0 %v219
    %317 = vmatprep.subr.mxu0 0.0
    %318 = vmatpush1.msra.mxu0 %v220
    %319 = vmatprep.subr.mxu0 0.0
    %320 = vmatpush1.msra.mxu0 %v221
    %321 = vmatprep.subr.mxu0 0.0
    %322 = vmatpush1.msra.mxu0 %v222
    %323 = vmatprep.subr.mxu0 0.0
    %324 = vmatpush1.msra.mxu0 %v223
    %325 = vmatprep.subr.mxu0 0.0
    %326 = vmatpush1.msra.mxu0 %v224
    %327 = vmatprep.subr.mxu0 0.0
    %328 = vmatpush1.msra.mxu0 %v225
    %329 = vmatprep.subr.mxu0 0.0
    %330 = vmatpush1.msra.mxu0 %v226
    %331 = vmatprep.subr.mxu0 0.0
    %332 = vmatpush1.msra.mxu0 %v227
    %333 = vmatprep.subr.mxu0 0.0
    %334 = vmatpush1.msra.mxu0 %v228
    %335 = vmatprep.subr.mxu0 0.0
    %336 = vmatpush1.msra.mxu0 0.0
    %337 = vmatprep.subr.mxu0 0.0
    %338 = vmatpush1.msra.mxu0 0.0
    %339 = vmatprep.subr.mxu0 0.0
    %340 = vmatpush1.msra.mxu0 0.0
    %341 = vmatprep.subr.mxu0 0.0
    %342 = vmatpush1.msra.mxu0 0.0
    %343 = vmatprep.subr.mxu0 0.0
    %344 = vmatpush1.msra.mxu0 0.0
    %345 = vmatprep.subr.mxu0 0.0
    %346 = vmatpush1.msra.mxu0 0.0
    %347 = vmatprep.subr.mxu0 0.0
    %348 = vmatpush1.msra.mxu0 0.0
    %349 = vmatprep.subr.mxu0 0.0
    %350 = vmatpush1.msra.mxu0 0.0
    %351 = vmatprep.subr.mxu0 0.0
    %352 = vmatpush1.msra.mxu0 0.0
    %353 = vmatprep.subr.mxu0 0.0
    %354 = vmatpush1.msra.mxu0 0.0
    %355 = vmatprep.subr.mxu0 0.0
    %356 = vmatpush1.msra.mxu0 0.0
    %357 = vmatprep.subr.mxu0 0.0
    %358 = vmatpush1.msra.mxu0 0.0
    %359 = vmatprep.subr.mxu0 0.0
    %360 = vmatpush1.msra.mxu0 0.0
    %361 = vmatprep.subr.mxu0 0.0
    %362 = vmatpush1.msra.mxu0 0.0
    %363 = vmatprep.subr.mxu0 0.0
    %364 = vmatpush1.msra.mxu0 0.0
    %365 = vmatprep.subr.mxu0 0.0
    %366 = vmatpush1.msra.mxu0 0.0
    %367 = vmatprep.mubr.f32.mxu0 0.0
    %368 = vmatmul.mubr.f32.gmra.mrb[0].mxu0 %v301
    %v369 = vpop.f32.mrb[0].mxu0
    %v370 = vadd.f32 0.0, %v369
    %v371 = vpop.f32.mrb[0].mxu0
    %372 = vdwg.mxu0
    %v373 = vadd.f32 %v302, %v370
    %v374 = vtanh.pop %v373
    %v375 = vld [vmem:[#allocation2 + $0x10] sm:$0xff]
    %376 = vmatprep.subr.mxu0 0.0
    %377 = vmatpush1.msra.mxu0 %v213
    %378 = vmatprep.subr.mxu0 0.0
    %379 = vmatpush1.msra.mxu0 %v214
    %380 = vmatprep.subr.mxu0 0.0
    %381 = vmatpush1.msra.mxu0 %v215
    %382 = vmatprep.subr.mxu0 0.0
    %383 = vmatpush1.msra.mxu0 %v216
    %384 = vmatprep.subr.mxu0 0.0
    %385 = vmatpush1.msra.mxu0 %v217
    %386 = vmatprep.subr.mxu0 0.0
    %387 = vmatpush1.msra.mxu0 %v218
    %388 = vmatprep.subr.mxu0 0.0
    %389 = vmatpush1.msra.mxu0 %v219
    %390 = vmatprep.subr.mxu0 0.0
    %391 = vmatpush1.msra.mxu0 %v220
    %392 = vmatprep.subr.mxu0 0.0
    %393 = vmatpush1.msra.mxu0 %v221
    %394 = vmatprep.subr.mxu0 0.0
    %395 = vmatpush1.msra.mxu0 %v222
    %396 = vmatprep.subr.mxu0 0.0
    %397 = vmatpush1.msra.mxu0 %v223
    %398 = vmatprep.subr.mxu0 0.0
    %399 = vmatpush1.msra.mxu0 %v224
    %400 = vmatprep.subr.mxu0 0.0
    %401 = vmatpush1.msra.mxu0 %v225
    %402 = vmatprep.subr.mxu0 0.0
    %403 = vmatpush1.msra.mxu0 %v226
    %404 = vmatprep.subr.mxu0 0.0
    %405 = vmatpush1.msra.mxu0 %v227
    %406 = vmatprep.subr.mxu0 0.0
    %407 = vmatpush1.msra.mxu0 %v228
    %408 = vmatprep.subr.mxu0 0.0
    %409 = vmatpush1.msra.mxu0 0.0
    %410 = vmatprep.subr.mxu0 0.0
    %411 = vmatpush1.msra.mxu0 0.0
    %412 = vmatprep.subr.mxu0 0.0
    %413 = vmatpush1.msra.mxu0 0.0
    %414 = vmatprep.subr.mxu0 0.0
    %415 = vmatpush1.msra.mxu0 0.0
    %416 = vmatprep.subr.mxu0 0.0
    %417 = vmatpush1.msra.mxu0 0.0
    %418 = vmatprep.subr.mxu0 0.0
    %419 = vmatpush1.msra.mxu0 0.0
    %420 = vmatprep.subr.mxu0 0.0
    %421 = vmatpush1.msra.mxu0 0.0
    %422 = vmatprep.subr.mxu0 0.0
    %423 = vmatpush1.msra.mxu0 0.0
    %424 = vmatprep.subr.mxu0 0.0
    %425 = vmatpush1.msra.mxu0 0.0
    %426 = vmatprep.subr.mxu0 0.0
    %427 = vmatpush1.msra.mxu0 0.0
    %428 = vmatprep.subr.mxu0 0.0
    %429 = vmatpush1.msra.mxu0 0.0
    %430 = vmatprep.subr.mxu0 0.0
    %431 = vmatpush1.msra.mxu0 0.0
    %432 = vmatprep.subr.mxu0 0.0
    %433 = vmatpush1.msra.mxu0 0.0
    %434 = vmatprep.subr.mxu0 0.0
    %435 = vmatpush1.msra.mxu0 0.0
    %436 = vmatprep.subr.mxu0 0.0
    %437 = vmatpush1.msra.mxu0 0.0
    %438 = vmatprep.subr.mxu0 0.0
    %439 = vmatpush1.msra.mxu0 0.0
    %440 = vmatprep.mubr.f32.mxu0 0.0
    %441 = vmatmul.mubr.f32.gmra.mrb[0].mxu0 %v374
    %v442 = vpop.f32.mrb[0].mxu0
    %v443 = vadd.f32 0.0, %v442
    %v444 = vpop.f32.mrb[0].mxu0
    %445 = vdwg.mxu0
    %v446 = vadd.f32 %v375, %v443
    %v447 = vtanh.pop %v446
    %v448 = vld [vmem:[#allocation2 + $0x18] sm:$0xff]
    %449 = vmatprep.subr.mxu0 0.0
    %450 = vmatpush1.msra.mxu0 %v213
    %451 = vmatprep.subr.mxu0 0.0
    %452 = vmatpush1.msra.mxu0 %v214
    %453 = vmatprep.subr.mxu0 0.0
    %454 = vmatpush1.msra.mxu0 %v215
    %455 = vmatprep.subr.mxu0 0.0
    %456 = vmatpush1.msra.mxu0 %v216
    %457 = vmatprep.subr.mxu0 0.0
    %458 = vmatpush1.msra.mxu0 %v217
    %459 = vmatprep.subr.mxu0 0.0
    %460 = vmatpush1.msra.mxu0 %v218
    %461 = vmatprep.subr.mxu0 0.0
    %462 = vmatpush1.msra.mxu0 %v219
    %463 = vmatprep.subr.mxu0 0.0
    %464 = vmatpush1.msra.mxu0 %v220
    %465 = vmatprep.subr.mxu0 0.0
    %466 = vmatpush1.msra.mxu0 %v221
    %467 = vmatprep.subr.mxu0 0.0
    %468 = vmatpush1.msra.mxu0 %v222
    %469 = vmatprep.subr.mxu0 0.0
    %470 = vmatpush1.msra.mxu0 %v223
    %471 = vmatprep.subr.mxu0 0.0
    %472 = vmatpush1.msra.mxu0 %v224
    %473 = vmatprep.subr.mxu0 0.0
    %474 = vmatpush1.msra.mxu0 %v225
    %475 = vmatprep.subr.mxu0 0.0
    %476 = vmatpush1.msra.mxu0 %v226
    %477 = vmatprep.subr.mxu0 0.0
    %478 = vmatpush1.msra.mxu0 %v227
    %479 = vmatprep.subr.mxu0 0.0
    %480 = vmatpush1.msra.mxu0 %v228
    %481 = vmatprep.subr.mxu0 0.0
    %482 = vmatpush1.msra.mxu0 0.0
    %483 = vmatprep.subr.mxu0 0.0
    %484 = vmatpush1.msra.mxu0 0.0
    %485 = vmatprep.subr.mxu0 0.0
    %486 = vmatpush1.msra.mxu0 0.0
    %487 = vmatprep.subr.mxu0 0.0
    %488 = vmatpush1.msra.mxu0 0.0
    %489 = vmatprep.subr.mxu0 0.0
    %490 = vmatpush1.msra.mxu0 0.0
    %491 = vmatprep.subr.mxu0 0.0
    %492 = vmatpush1.msra.mxu0 0.0
    %493 = vmatprep.subr.mxu0 0.0
    %494 = vmatpush1.msra.mxu0 0.0
    %495 = vmatprep.subr.mxu0 0.0
    %496 = vmatpush1.msra.mxu0 0.0
    %497 = vmatprep.subr.mxu0 0.0
    %498 = vmatpush1.msra.mxu0 0.0
    %499 = vmatprep.subr.mxu0 0.0
    %500 = vmatpush1.msra.mxu0 0.0
    %501 = vmatprep.subr.mxu0 0.0
    %502 = vmatpush1.msra.mxu0 0.0
    %503 = vmatprep.subr.mxu0 0.0
    %504 = vmatpush1.msra.mxu0 0.0
    %505 = vmatprep.subr.mxu0 0.0
    %506 = vmatpush1.msra.mxu0 0.0
    %507 = vmatprep.subr.mxu0 0.0
    %508 = vmatpush1.msra.mxu0 0.0
    %509 = vmatprep.subr.mxu0 0.0
    %510 = vmatpush1.msra.mxu0 0.0
    %511 = vmatprep.subr.mxu0 0.0
    %512 = vmatpush1.msra.mxu0 0.0
    %513 = vmatprep.mubr.f32.mxu0 0.0
    %514 = vmatmul.mubr.f32.gmra.mrb[0].mxu0 %v447
    %v515 = vpop.f32.mrb[0].mxu0
    %v516 = vadd.f32 0.0, %v515
    %v517 = vpop.f32.mrb[0].mxu0
    %518 = vdwg.mxu0
    %v519 = vadd.f32 %v448, %v516
    %v520 = vtanh.pop %v519
    %v521 = vld [vmem:[#allocation2 + $0x20] sm:$0xff]
    %522 = vmatprep.subr.mxu0 0.0
    %523 = vmatpush1.msra.mxu0 %v213
    %524 = vmatprep.subr.mxu0 0.0
    %525 = vmatpush1.msra.mxu0 %v214
    %526 = vmatprep.subr.mxu0 0.0
    %527 = vmatpush1.msra.mxu0 %v215
    %528 = vmatprep.subr.mxu0 0.0
    %529 = vmatpush1.msra.mxu0 %v216
    %530 = vmatprep.subr.mxu0 0.0
    %531 = vmatpush1.msra.mxu0 %v217
    %532 = vmatprep.subr.mxu0 0.0
    %533 = vmatpush1.msra.mxu0 %v218
    %534 = vmatprep.subr.mxu0 0.0
    %535 = vmatpush1.msra.mxu0 %v219
    %536 = vmatprep.subr.mxu0 0.0
    %537 = vmatpush1.msra.mxu0 %v220
    %538 = vmatprep.subr.mxu0 0.0
    %539 = vmatpush1.msra.mxu0 %v221
    %540 = vmatprep.subr.mxu0 0.0
    %541 = vmatpush1.msra.mxu0 %v222
    %542 = vmatprep.subr.mxu0 0.0
    %543 = vmatpush1.msra.mxu0 %v223
    %544 = vmatprep.subr.mxu0 0.0
    %545 = vmatpush1.msra.mxu0 %v224
    %546 = vmatprep.subr.mxu0 0.0
    %547 = vmatpush1.msra.mxu0 %v225
    %548 = vmatprep.subr.mxu0 0.0
    %549 = vmatpush1.msra.mxu0 %v226
    %550 = vmatprep.subr.mxu0 0.0
    %551 = vmatpush1.msra.mxu0 %v227
    %552 = vmatprep.subr.mxu0 0.0
    %553 = vmatpush1.msra.mxu0 %v228
    %554 = vmatprep.subr.mxu0 0.0
    %555 = vmatpush1.msra.mxu0 0.0
    %556 = vmatprep.subr.mxu0 0.0
    %557 = vmatpush1.msra.mxu0 0.0
    %558 = vmatprep.subr.mxu0 0.0
    %559 = vmatpush1.msra.mxu0 0.0
    %560 = vmatprep.subr.mxu0 0.0
    %561 = vmatpush1.msra.mxu0 0.0
    %562 = vmatprep.subr.mxu0 0.0
    %563 = vmatpush1.msra.mxu0 0.0
    %564 = vmatprep.subr.mxu0 0.0
    %565 = vmatpush1.msra.mxu0 0.0
    %566 = vmatprep.subr.mxu0 0.0
    %567 = vmatpush1.msra.mxu0 0.0
    %568 = vmatprep.subr.mxu0 0.0
    %569 = vmatpush1.msra.mxu0 0.0
    %570 = vmatprep.subr.mxu0 0.0
    %571 = vmatpush1.msra.mxu0 0.0
    %572 = vmatprep.subr.mxu0 0.0
    %573 = vmatpush1.msra.mxu0 0.0
    %574 = vmatprep.subr.mxu0 0.0
    %575 = vmatpush1.msra.mxu0 0.0
    %576 = vmatprep.subr.mxu0 0.0
    %577 = vmatpush1.msra.mxu0 0.0
    %578 = vmatprep.subr.mxu0 0.0
    %579 = vmatpush1.msra.mxu0 0.0
    %580 = vmatprep.subr.mxu0 0.0
    %581 = vmatpush1.msra.mxu0 0.0
    %582 = vmatprep.subr.mxu0 0.0
    %583 = vmatpush1.msra.mxu0 0.0
    %584 = vmatprep.subr.mxu0 0.0
    %585 = vmatpush1.msra.mxu0 0.0
    %586 = vmatprep.mubr.f32.mxu0 0.0
    %587 = vmatmul.mubr.f32.gmra.mrb[0].mxu0 %v520
    %v588 = vpop.f32.mrb[0].mxu0
    %v589 = vadd.f32 0.0, %v588
    %v590 = vpop.f32.mrb[0].mxu0
    %591 = vdwg.mxu0
    %v592 = vadd.f32 %v521, %v589
    %v593 = vtanh.pop %v592
    %v594 = vld [vmem:[#allocation2 + $0x28] sm:$0xff]
    %595 = vmatprep.subr.mxu0 0.0
    %596 = vmatpush1.msra.mxu0 %v213
    %597 = vmatprep.subr.mxu0 0.0
    %598 = vmatpush1.msra.mxu0 %v214
    %599 = vmatprep.subr.mxu0 0.0
    %600 = vmatpush1.msra.mxu0 %v215
    %601 = vmatprep.subr.mxu0 0.0
    %602 = vmatpush1.msra.mxu0 %v216
    %603 = vmatprep.subr.mxu0 0.0
    %604 = vmatpush1.msra.mxu0 %v217
    %605 = vmatprep.subr.mxu0 0.0
    %606 = vmatpush1.msra.mxu0 %v218
    %607 = vmatprep.subr.mxu0 0.0
    %608 = vmatpush1.msra.mxu0 %v219
    %609 = vmatprep.subr.mxu0 0.0
    %610 = vmatpush1.msra.mxu0 %v220
    %611 = vmatprep.subr.mxu0 0.0
    %612 = vmatpush1.msra.mxu0 %v221
    %613 = vmatprep.subr.mxu0 0.0
    %614 = vmatpush1.msra.mxu0 %v222
    %615 = vmatprep.subr.mxu0 0.0
    %616 = vmatpush1.msra.mxu0 %v223
    %617 = vmatprep.subr.mxu0 0.0
    %618 = vmatpush1.msra.mxu0 %v224
    %619 = vmatprep.subr.mxu0 0.0
    %620 = vmatpush1.msra.mxu0 %v225
    %621 = vmatprep.subr.mxu0 0.0
    %622 = vmatpush1.msra.mxu0 %v226
    %623 = vmatprep.subr.mxu0 0.0
    %624 = vmatpush1.msra.mxu0 %v227
    %625 = vmatprep.subr.mxu0 0.0
    %626 = vmatpush1.msra.mxu0 %v228
    %627 = vmatprep.subr.mxu0 0.0
    %628 = vmatpush1.msra.mxu0 0.0
    %629 = vmatprep.subr.mxu0 0.0
    %630 = vmatpush1.msra.mxu0 0.0
    %631 = vmatprep.subr.mxu0 0.0
    %632 = vmatpush1.msra.mxu0 0.0
    %633 = vmatprep.subr.mxu0 0.0
    %634 = vmatpush1.msra.mxu0 0.0
    %635 = vmatprep.subr.mxu0 0.0
    %636 = vmatpush1.msra.mxu0 0.0
    %637 = vmatprep.subr.mxu0 0.0
    %638 = vmatpush1.msra.mxu0 0.0
    %639 = vmatprep.subr.mxu0 0.0
    %640 = vmatpush1.msra.mxu0 0.0
    %641 = vmatprep.subr.mxu0 0.0
    %642 = vmatpush1.msra.mxu0 0.0
    %643 = vmatprep.subr.mxu0 0.0
    %644 = vmatpush1.msra.mxu0 0.0
    %645 = vmatprep.subr.mxu0 0.0
    %646 = vmatpush1.msra.mxu0 0.0
    %647 = vmatprep.subr.mxu0 0.0
    %648 = vmatpush1.msra.mxu0 0.0
    %649 = vmatprep.subr.mxu0 0.0
    %650 = vmatpush1.msra.mxu0 0.0
    %651 = vmatprep.subr.mxu0 0.0
    %652 = vmatpush1.msra.mxu0 0.0
    %653 = vmatprep.subr.mxu0 0.0
    %654 = vmatpush1.msra.mxu0 0.0
    %655 = vmatprep.subr.mxu0 0.0
    %656 = vmatpush1.msra.mxu0 0.0
    %657 = vmatprep.subr.mxu0 0.0
    %658 = vmatpush1.msra.mxu0 0.0
    %659 = vmatprep.mubr.f32.mxu0 0.0
    %660 = vmatmul.mubr.f32.gmra.mrb[0].mxu0 %v593
    %v661 = vpop.f32.mrb[0].mxu0
    %v662 = vadd.f32 0.0, %v661
    %v663 = vpop.f32.mrb[0].mxu0
    %664 = vdwg.mxu0
    %v665 = vadd.f32 %v594, %v662
    %v666 = vtanh.pop %v665
    %v667 = vld [vmem:[#allocation2 + $0x30] sm:$0xff]
    %668 = vmatprep.subr.mxu0 0.0
    %669 = vmatpush1.msra.mxu0 %v213
    %670 = vmatprep.subr.mxu0 0.0
    %671 = vmatpush1.msra.mxu0 %v214
    %672 = vmatprep.subr.mxu0 0.0
    %673 = vmatpush1.msra.mxu0 %v215
    %674 = vmatprep.subr.mxu0 0.0
    %675 = vmatpush1.msra.mxu0 %v216
    %676 = vmatprep.subr.mxu0 0.0
    %677 = vmatpush1.msra.mxu0 %v217
    %678 = vmatprep.subr.mxu0 0.0
    %679 = vmatpush1.msra.mxu0 %v218
    %680 = vmatprep.subr.mxu0 0.0
    %681 = vmatpush1.msra.mxu0 %v219
    %682 = vmatprep.subr.mxu0 0.0
    %683 = vmatpush1.msra.mxu0 %v220
    %684 = vmatprep.subr.mxu0 0.0
    %685 = vmatpush1.msra.mxu0 %v221
    %686 = vmatprep.subr.mxu0 0.0
    %687 = vmatpush1.msra.mxu0 %v222
    %688 = vmatprep.subr.mxu0 0.0
    %689 = vmatpush1.msra.mxu0 %v223
    %690 = vmatprep.subr.mxu0 0.0
    %691 = vmatpush1.msra.mxu0 %v224
    %692 = vmatprep.subr.mxu0 0.0
    %693 = vmatpush1.msra.mxu0 %v225
    %694 = vmatprep.subr.mxu0 0.0
    %695 = vmatpush1.msra.mxu0 %v226
    %696 = vmatprep.subr.mxu0 0.0
    %697 = vmatpush1.msra.mxu0 %v227
    %698 = vmatprep.subr.mxu0 0.0
    %699 = vmatpush1.msra.mxu0 %v228
    %700 = vmatprep.subr.mxu0 0.0
    %701 = vmatpush1.msra.mxu0 0.0
    %702 = vmatprep.subr.mxu0 0.0
    %703 = vmatpush1.msra.mxu0 0.0
    %704 = vmatprep.subr.mxu0 0.0
    %705 = vmatpush1.msra.mxu0 0.0
    %706 = vmatprep.subr.mxu0 0.0
    %707 = vmatpush1.msra.mxu0 0.0
    %708 = vmatprep.subr.mxu0 0.0
    %709 = vmatpush1.msra.mxu0 0.0
    %710 = vmatprep.subr.mxu0 0.0
    %711 = vmatpush1.msra.mxu0 0.0
    %712 = vmatprep.subr.mxu0 0.0
    %713 = vmatpush1.msra.mxu0 0.0
    %714 = vmatprep.subr.mxu0 0.0
    %715 = vmatpush1.msra.mxu0 0.0
    %716 = vmatprep.subr.mxu0 0.0
    %717 = vmatpush1.msra.mxu0 0.0
    %718 = vmatprep.subr.mxu0 0.0
    %719 = vmatpush1.msra.mxu0 0.0
    %720 = vmatprep.subr.mxu0 0.0
    %721 = vmatpush1.msra.mxu0 0.0
    %722 = vmatprep.subr.mxu0 0.0
    %723 = vmatpush1.msra.mxu0 0.0
    %724 = vmatprep.subr.mxu0 0.0
    %725 = vmatpush1.msra.mxu0 0.0
    %726 = vmatprep.subr.mxu0 0.0
    %727 = vmatpush1.msra.mxu0 0.0
    %728 = vmatprep.subr.mxu0 0.0
    %729 = vmatpush1.msra.mxu0 0.0
    %730 = vmatprep.subr.mxu0 0.0
    %731 = vmatpush1.msra.mxu0 0.0
    %732 = vmatprep.mubr.f32.mxu0 0.0
    %733 = vmatmul.mubr.f32.gmra.mrb[0].mxu0 %v666
    %v734 = vpop.f32.mrb[0].mxu0
    %v735 = vadd.f32 0.0, %v734
    %v736 = vpop.f32.mrb[0].mxu0
    %737 = vdwg.mxu0
    %v738 = vadd.f32 %v667, %v735
    %v739 = vtanh.pop %v738
    %v740 = vld [vmem:[#allocation2 + $0x38] sm:$0xff]
    %741 = vmatprep.subr.mxu0 0.0
    %742 = vmatpush1.msra.mxu0 %v213
    %743 = vmatprep.subr.mxu0 0.0
    %744 = vmatpush1.msra.mxu0 %v214
    %745 = vmatprep.subr.mxu0 0.0
    %746 = vmatpush1.msra.mxu0 %v215
    %747 = vmatprep.subr.mxu0 0.0
    %748 = vmatpush1.msra.mxu0 %v216
    %749 = vmatprep.subr.mxu0 0.0
    %750 = vmatpush1.msra.mxu0 %v217
    %751 = vmatprep.subr.mxu0 0.0
    %752 = vmatpush1.msra.mxu0 %v218
    %753 = vmatprep.subr.mxu0 0.0
    %754 = vmatpush1.msra.mxu0 %v219
    %755 = vmatprep.subr.mxu0 0.0
    %756 = vmatpush1.msra.mxu0 %v220
    %757 = vmatprep.subr.mxu0 0.0
    %758 = vmatpush1.msra.mxu0 %v221
    %759 = vmatprep.subr.mxu0 0.0
    %760 = vmatpush1.msra.mxu0 %v222
    %761 = vmatprep.subr.mxu0 0.0
    %762 = vmatpush1.msra.mxu0 %v223
    %763 = vmatprep.subr.mxu0 0.0
    %764 = vmatpush1.msra.mxu0 %v224
    %765 = vmatprep.subr.mxu0 0.0
    %766 = vmatpush1.msra.mxu0 %v225
    %767 = vmatprep.subr.mxu0 0.0
    %768 = vmatpush1.msra.mxu0 %v226
    %769 = vmatprep.subr.mxu0 0.0
    %770 = vmatpush1.msra.mxu0 %v227
    %771 = vmatprep.subr.mxu0 0.0
    %772 = vmatpush1.msra.mxu0 %v228
    %773 = vmatprep.subr.mxu0 0.0
    %774 = vmatpush1.msra.mxu0 0.0
    %775 = vmatprep.subr.mxu0 0.0
    %776 = vmatpush1.msra.mxu0 0.0
    %777 = vmatprep.subr.mxu0 0.0
    %778 = vmatpush1.msra.mxu0 0.0
    %779 = vmatprep.subr.mxu0 0.0
    %780 = vmatpush1.msra.mxu0 0.0
    %781 = vmatprep.subr.mxu0 0.0
    %782 = vmatpush1.msra.mxu0 0.0
    %783 = vmatprep.subr.mxu0 0.0
    %784 = vmatpush1.msra.mxu0 0.0
    %785 = vmatprep.subr.mxu0 0.0
    %786 = vmatpush1.msra.mxu0 0.0
    %787 = vmatprep.subr.mxu0 0.0
    %788 = vmatpush1.msra.mxu0 0.0
    %789 = vmatprep.subr.mxu0 0.0
    %790 = vmatpush1.msra.mxu0 0.0
    %791 = vmatprep.subr.mxu0 0.0
    %792 = vmatpush1.msra.mxu0 0.0
    %793 = vmatprep.subr.mxu0 0.0
    %794 = vmatpush1.msra.mxu0 0.0
    %795 = vmatprep.subr.mxu0 0.0
    %796 = vmatpush1.msra.mxu0 0.0
    %797 = vmatprep.subr.mxu0 0.0
    %798 = vmatpush1.msra.mxu0 0.0
    %799 = vmatprep.subr.mxu0 0.0
    %800 = vmatpush1.msra.mxu0 0.0
    %801 = vmatprep.subr.mxu0 0.0
    %802 = vmatpush1.msra.mxu0 0.0
    %803 = vmatprep.subr.mxu0 0.0
    %804 = vmatpush1.msra.mxu0 0.0
    %805 = vmatprep.mubr.f32.mxu0 0.0
    %806 = vmatmul.mubr.f32.gmra.mrb[0].mxu0 %v739
    %v807 = vpop.f32.mrb[0].mxu0
    %v808 = vadd.f32 0.0, %v807
    %v809 = vpop.f32.mrb[0].mxu0
    %810 = vdwg.mxu0
    %v811 = vadd.f32 %v740, %v808
    %v812 = vtanh.pop %v811
    %v813 = vld [vmem:[#allocation6] sm:$0xff]
    %v814 = vld [vmem:[#allocation6 + $0x8] sm:$0xff]
    %v815 = vld [vmem:[#allocation6 + $0x10] sm:$0xff]
    %v816 = vld [vmem:[#allocation6 + $0x18] sm:$0xff]
    %v817 = vld [vmem:[#allocation6 + $0x20] sm:$0xff]
    %v818 = vld [vmem:[#allocation6 + $0x28] sm:$0xff]
    %v819 = vld [vmem:[#allocation6 + $0x30] sm:$0xff]
    %v820 = vld [vmem:[#allocation6 + $0x38] sm:$0xff]
    %v821 = vld [vmem:[#allocation6 + $0x40] sm:$0xff]
    %v822 = vld [vmem:[#allocation6 + $0x48] sm:$0xff]
    %v823 = vld [vmem:[#allocation6 + $0x50] sm:$0xff]
    %v824 = vld [vmem:[#allocation6 + $0x58] sm:$0xff]
    %v825 = vld [vmem:[#allocation6 + $0x60] sm:$0xff]
    %v826 = vld [vmem:[#allocation6 + $0x68] sm:$0xff]
    %v827 = vld [vmem:[#allocation6 + $0x70] sm:$0xff]
    %v828 = vld [vmem:[#allocation6 + $0x78] sm:$0xff]
    %v829 = vld [vmem:[%s5] sm:$0x1]
    %v831 = vlaneseq
    %v832 = vshrl.u32 %v831, 7
    %v833 = vsub.s32 0, %v832
    %v834 = vrot.slane %v829, %v833
    %836 = vmatprep.subr.mxu0 0.0
    %837 = vmatpush1.msra.mxu0 %v813
    %838 = vmatprep.subr.mxu0 0.0
    %839 = vmatpush1.msra.mxu0 %v814
    %840 = vmatprep.subr.mxu0 0.0
    %841 = vmatpush1.msra.mxu0 %v815
    %842 = vmatprep.subr.mxu0 0.0
    %843 = vmatpush1.msra.mxu0 %v816
    %844 = vmatprep.subr.mxu0 0.0
    %845 = vmatpush1.msra.mxu0 %v817
    %846 = vmatprep.subr.mxu0 0.0
    %847 = vmatpush1.msra.mxu0 %v818
    %848 = vmatprep.subr.mxu0 0.0
    %849 = vmatpush1.msra.mxu0 %v819
    %850 = vmatprep.subr.mxu0 0.0
    %851 = vmatpush1.msra.mxu0 %v820
    %852 = vmatprep.subr.mxu0 0.0
    %853 = vmatpush1.msra.mxu0 %v821
    %854 = vmatprep.subr.mxu0 0.0
    %855 = vmatpush1.msra.mxu0 %v822
    %856 = vmatprep.subr.mxu0 0.0
    %857 = vmatpush1.msra.mxu0 %v823
    %858 = vmatprep.subr.mxu0 0.0
    %859 = vmatpush1.msra.mxu0 %v824
    %860 = vmatprep.subr.mxu0 0.0
    %861 = vmatpush1.msra.mxu0 %v825
    %862 = vmatprep.subr.mxu0 0.0
    %863 = vmatpush1.msra.mxu0 %v826
    %864 = vmatprep.subr.mxu0 0.0
    %865 = vmatpush1.msra.mxu0 %v827
    %866 = vmatprep.subr.mxu0 0.0
    %867 = vmatpush1.msra.mxu0 %v828
    %868 = vmatprep.subr.mxu0 0.0
    %869 = vmatpush1.msra.mxu0 0.0
    %870 = vmatprep.subr.mxu0 0.0
    %871 = vmatpush1.msra.mxu0 0.0
    %872 = vmatprep.subr.mxu0 0.0
    %873 = vmatpush1.msra.mxu0 0.0
    %874 = vmatprep.subr.mxu0 0.0
    %875 = vmatpush1.msra.mxu0 0.0
    %876 = vmatprep.subr.mxu0 0.0
    %877 = vmatpush1.msra.mxu0 0.0
    %878 = vmatprep.subr.mxu0 0.0
    %879 = vmatpush1.msra.mxu0 0.0
    %880 = vmatprep.subr.mxu0 0.0
    %881 = vmatpush1.msra.mxu0 0.0
    %882 = vmatprep.subr.mxu0 0.0
    %883 = vmatpush1.msra.mxu0 0.0
    %884 = vmatprep.subr.mxu0 0.0
    %885 = vmatpush1.msra.mxu0 0.0
    %886 = vmatprep.subr.mxu0 0.0
    %887 = vmatpush1.msra.mxu0 0.0
    %888 = vmatprep.subr.mxu0 0.0
    %889 = vmatpush1.msra.mxu0 0.0
    %890 = vmatprep.subr.mxu0 0.0
    %891 = vmatpush1.msra.mxu0 0.0
    %892 = vmatprep.subr.mxu0 0.0
    %893 = vmatpush1.msra.mxu0 0.0
    %894 = vmatprep.subr.mxu0 0.0
    %895 = vmatpush1.msra.mxu0 0.0
    %896 = vmatprep.subr.mxu0 0.0
    %897 = vmatpush1.msra.mxu0 0.0
    %898 = vmatprep.subr.mxu0 0.0
    %899 = vmatpush1.msra.mxu0 0.0
    %900 = vmatprep.mubr.f32.mxu0 0.0
    %901 = vmatmul.mubr.f32.gmra.mrb[0].mxu0 %v812
    %v902 = vpop.f32.mrb[0].mxu0
    %v903 = vadd.f32 %v834, %v902
    %v904 = vpop.f32.mrb[0].mxu0
    %905 = vdwg.mxu0
    %906 = vst [vmem:[#allocation8] sm:$0xff] %v903
    // Predicated region
    $region34: #{tpu_custom_call.1} parent=1 // pred_check
      _
    $region35: #{tpu_custom_call.1} parent=1 // pred_check_branch
      %908 = sbr.rel (0) target = $region37
    $region36: #{tpu_custom_call.1} parent=1 // pred_region
      %s910 = ssub.s32 128, 128
      %911 = vsyncadd [#allocation5], %s910
      %s913 = sshll.u32 [#allocation8], 4
      %s914 = int_to_ptr.vmem [resolvable:$true] %s913
      %916 = dma.vmem_to_hbm [thread:$0]  %s914, 128, %s6, [#allocation5]
    $region37: #{tpu_custom_call.1} parent=1 // pred_fallthru
      _
    // Predicated region
    $region38: #{tpu_custom_call.1} parent=1 // pred_check
      _
    $region39: #{tpu_custom_call.1} parent=1 // pred_check_branch
      %918 = sbr.rel (0) target = $region41
    $region40: #{tpu_custom_call.1} parent=1 // pred_region
      %919 = dma.done [#allocation5], 128
    $region41: #{tpu_custom_call.1} parent=1 // pred_fallthru
      _
    %920 = vsyncpa [#allocation4], 1
    %921 = vsyncpa [#allocation7], 1
    %922 = vsyncpa [#allocation5], 1

</llo_original>
